<compile_context>
chip_gen: v7x
topology: tpu7x:2x2x1
jax: 0.10.0
libtpu: 0.0.40
codegen_flags: <defaults>
</compile_context>

<pallas_src>
import functools

import jax
import jax.numpy as jnp
from jax.experimental import pallas as pl
from jax.experimental.pallas import tpu as pltpu


def _crop_kernel(st_ref, x_hbm, o_hbm, sem, *, size, block_rows, rem, batch):
    # st_ref : SMEM scalar-prefetch ref, shape (1,), int32 crop start along T
    # x_hbm  : full (B, T, D) input left in HBM (memory_space=pl.ANY)
    # o_hbm  : full (B, size, D) output left in HBM (memory_space=pl.ANY)
    # sem    : DMA completion semaphores, shape (2,)
    i = pl.program_id(0)
    st = st_ref[0]
    row = pl.multiple_of(i * block_rows, block_rows)

    cp = pltpu.make_async_copy(
        x_hbm.at[pl.ds(row, block_rows), pl.ds(st, size), :],
        o_hbm.at[pl.ds(row, block_rows), :, :],
        sem.at[0],
    )
    cp.start()

    if rem:  # statically-known ragged tail, copied by the last grid step
        tail_row = batch - rem

        @pl.when(i == pl.num_programs(0) - 1)
        def _():
            cp_tail = pltpu.make_async_copy(
                x_hbm.at[pl.ds(tail_row, rem), pl.ds(st, size), :],
                o_hbm.at[pl.ds(tail_row, rem), :, :],
                sem.at[1],
            )
            cp_tail.start()
            cp_tail.wait()

    cp.wait()


def _default_num_steps(batch):
    # Single descriptor on single-TensorCore chips (v5e/v6e); exactly two on
    # dual-TC v7x so each core issues one DMA.  Unknown chips fall back to the
    # always-correct single-step path.
    try:
        kind = jax.devices()[0].device_kind.lower()
    except Exception:  # pragma: no cover - defensive
        kind = ""
    dual_tc = "v7" in kind
    return 2 if (dual_tc and batch >= 2) else 1


def random_crop_pallas(x, size, key, num_steps=None):
    """x[:, st:st+size] with st ~ U[0, T-size], drawn deterministically from `key`."""
    B, T, D = x.shape
    assert T >= size
    # Random start offset computed in plain JAX glue (replaces torch.randint),
    # passed to the kernel via scalar prefetch.
    st = jax.random.randint(key, (1,), 0, T - size + 1, dtype=jnp.int32)

    if num_steps is None:
        num_steps = _default_num_steps(B)
    num_steps = max(1, min(int(num_steps), B))
    block_rows = B // num_steps
    rem = B - num_steps * block_rows  # statically-known tail rows

    kernel = functools.partial(
        _crop_kernel, size=size, block_rows=block_rows, rem=rem, batch=B
    )

    itemsize = jnp.dtype(x.dtype).itemsize
    return pl.pallas_call(
        kernel,
        out_shape=jax.ShapeDtypeStruct((B, size, D), x.dtype),
        grid_spec=pltpu.PrefetchScalarGridSpec(
            num_scalar_prefetch=1,
            grid=(num_steps,),
            in_specs=[pl.BlockSpec(memory_space=pl.ANY)],
            out_specs=pl.BlockSpec(memory_space=pl.ANY),
            scratch_shapes=[pltpu.SemaphoreType.DMA((2,))],
        ),
        compiler_params=pltpu.CompilerParams(
            dimension_semantics=("parallel",),
        ),
        cost_estimate=pl.CostEstimate(
            flops=0,
            transcendentals=0,
            bytes_accessed=2 * B * size * D * itemsize,
        ),
    )(st, x)


if __name__ == "__main__":
    key = jax.random.PRNGKey(0)
    k_data, k_crop = jax.random.split(key)

    B, T, D = 2, 16, 128
    SIZE = 8

    x = jax.random.normal(k_data, (B, T, D), dtype=jnp.float32)
    out = jax.block_until_ready(random_crop_pallas(x, SIZE, k_crop))

    # Reference check: recompute the same start offset and slice in plain JAX.
    st = int(jax.random.randint(k_crop, (1,), 0, T - SIZE + 1, dtype=jnp.int32)[0])
    ref = x[:, st:st + SIZE]
    assert out.shape == (B, SIZE, D)
    assert jnp.allclose(out, ref), "mismatch vs reference slice"

    # Exercise the ragged-batch path explicitly (2 steps + static tail copy).
    B2 = 5
    x2 = jax.random.normal(k_data, (B2, T, D), dtype=jnp.float32)
    out2 = jax.block_until_ready(random_crop_pallas(x2, SIZE, k_crop, num_steps=2))
    ref2 = x2[:, st:st + SIZE]
    assert out2.shape == (B2, SIZE, D)
    assert jnp.allclose(out2, ref2), "mismatch vs reference slice (ragged batch)"

    print("KERNEL_OK")
</pallas_src>

<mosaic_0001>
module attributes {stable_mosaic.version = 11 : i64} {
  func.func @_crop_kernel(%arg0: i32, %arg1: memref<1xi32, #tpu.memory_space<smem>>, %arg2: memref<2x16x128xf32, #tpu.memory_space<any>>, %arg3: memref<2x8x128xf32, #tpu.memory_space<any>>, %arg4: memref<2x!tpu.dma_semaphore, #tpu.memory_space<semaphore_mem>>) attributes {dimension_semantics = [#tpu.dimension_semantics<parallel>], iteration_bounds = array<i64: 1>, scalar_prefetch = 1 : i64, scratch_operands = 1 : i64, tpu.core_type = #tpu.core_type<tc>, window_params = [{}, {}]} {
    %c0 = arith.constant 0 : index
    %0 = memref.load %arg1[%c0] : memref<1xi32, #tpu.memory_space<smem>>
    %c2_i32 = arith.constant 2 : i32
    %1 = arith.muli %arg0, %c2_i32 : i32
    %2 = tpu.assume_multiple %1, 2 : i32
    %c0_i32 = arith.constant 0 : i32
    %c0_i32_0 = arith.constant 0 : i32
    %3 = tpu.memref_slice %arg2[%2, %0, %c0_i32_0] : memref<2x16x128xf32, #tpu.memory_space<any>> -> memref<2x8x128xf32, #tpu.memory_space<any>>
    %c0_i32_1 = arith.constant 0 : i32
    %c0_i32_2 = arith.constant 0 : i32
    %4 = tpu.memref_slice %arg3[%2, %c0_i32_1, %c0_i32_2] : memref<2x8x128xf32, #tpu.memory_space<any>> -> memref<2x8x128xf32, #tpu.memory_space<any>>
    %5 = tpu.memref_slice %arg4[%c0_i32] : memref<2x!tpu.dma_semaphore, #tpu.memory_space<semaphore_mem>> -> memref<1x!tpu.dma_semaphore, #tpu.memory_space<semaphore_mem>>
    %6 = tpu.memref_squeeze %5 : memref<1x!tpu.dma_semaphore, #tpu.memory_space<semaphore_mem>> -> memref<!tpu.dma_semaphore, #tpu.memory_space<semaphore_mem>>
    tpu.enqueue_dma source(%3 : memref<2x8x128xf32, #tpu.memory_space<any>>) target(%4 : memref<2x8x128xf32, #tpu.memory_space<any>>) target_semaphore(%6 : memref<!tpu.dma_semaphore, #tpu.memory_space<semaphore_mem>>)
    %c0_i32_3 = arith.constant 0 : i32
    %c0_i32_4 = arith.constant 0 : i32
    %7 = tpu.memref_slice %arg2[%2, %0, %c0_i32_4] : memref<2x16x128xf32, #tpu.memory_space<any>> -> memref<2x8x128xf32, #tpu.memory_space<any>>
    %c0_i32_5 = arith.constant 0 : i32
    %c0_i32_6 = arith.constant 0 : i32
    %8 = tpu.memref_slice %arg3[%2, %c0_i32_5, %c0_i32_6] : memref<2x8x128xf32, #tpu.memory_space<any>> -> memref<2x8x128xf32, #tpu.memory_space<any>>
    %9 = tpu.memref_slice %arg4[%c0_i32_3] : memref<2x!tpu.dma_semaphore, #tpu.memory_space<semaphore_mem>> -> memref<1x!tpu.dma_semaphore, #tpu.memory_space<semaphore_mem>>
    %10 = tpu.memref_squeeze %9 : memref<1x!tpu.dma_semaphore, #tpu.memory_space<semaphore_mem>> -> memref<!tpu.dma_semaphore, #tpu.memory_space<semaphore_mem>>
    tpu.wait_dma2 semaphore(%10 : memref<!tpu.dma_semaphore, #tpu.memory_space<semaphore_mem>>) src(%7 : memref<2x8x128xf32, #tpu.memory_space<any>>) dst(%8 : memref<2x8x128xf32, #tpu.memory_space<any>>)
    return
  }
}

</mosaic_0001>

<llo_original>
// kernel: tpu_custom_call.1
$region0: #{tpu_custom_call.1}
  #allocation0 [shape = 'u32[]', space=smem, size = 0x4, offset = 0x4, fixed_abs, tag = 'smem constant byte address 0x4 - core index']
  #allocation1 [shape = 'u32[144,128]{1,0:T(1,128)}', space=vmem, size = 0x12000, scoped, tag = 'internal scratch']
  #allocation2 [shape = 's32[2]{0}', space=sflag, size = 0x8, scoped, tag = 'scratch operand']
  #allocation3 [shape = 's32[1]{0}', space=sflag, size = 0x4, scoped, tag = 'scoped memory for tpu_custom_call.1']
  #allocation4 [shape = 's32[1]{0:T(128)S(6)}', space=smem, size = 0x200, scoped, tag = 'prefetched SMEM operand 0']
  #allocation5 [shape = 's32[]', space=sflag, size = 0x4, offset = 0, fixed_abs, tag = 'sflag constant byte address 0x0 - dummy sync flag']
  %s0 = inlined_call_operand.<no memory space> [shape: s32[1], index: 0, kind: input, shape index: {}]
  %s1 = inlined_call_operand.hbm [shape: f32[2,16,128], index: 1, kind: input, shape index: {}]
  %s2 = inlined_call_operand.hbm [shape: f32[2,8,128], index: 2, kind: output, shape index: {}]
  %s3 = sld [smem:[#allocation0]]
  $region2: #{tpu_custom_call.1} parent=0
    _
  %s5 = ssub.s32 1, %s3
  %s6 = scalar_select 0, %s5, %s3
  %7 = sst [smem:[#allocation4]] %s0
  $region1: #{tpu_custom_call.1} parent=0
    #allocation6 [shape = 'u32[3]{0}', space=smem, size = 0xc, scoped, tag = 'DMA stride descriptor']
    %s8 = sld [smem:[#allocation4]]
    %s9 = smul.u32 0, 2
    %s10 = smul.u32 %s9, 16
    %s11 = sadd.s32 %s8, %s10
    %s12 = smul.addr %s11, 16
    %s13 = scalar_lea.hbm %s1, %s12
    %s14 = smul.u32 %s9, 8
    %s15 = smul.addr %s14, 16
    %s16 = scalar_lea.hbm %s2, %s15
    %s18 = sshll.u32 1, 14
    %s19 = sxor.u32 4294967295, %s18
    %s22 = sshll.u32 3, 24
    %s23 = sxor.u32 4294967295, %s22
    %s24 = sand.u32 0, %s23
    %s26 = sor.u32 %s24, 0
    %29 = sst [smem:[#allocation6]] 256
    %s30 = scalar_lea.smem [#allocation6], 1
    %31 = sst [smem:[%s30]] 128
    %s32 = scalar_lea.smem [#allocation6], 2
    %33 = sst [smem:[%s32]] 8
    %35 = dma.general %s13, 256, %s16, [#allocation2], [#allocation5], [#allocation6], %s26, 0
    %s36 = smul.u32 2, 8
    %s37 = smul.u32 %s36, 1
    %s38 = sshll.u32 %s37, 4
    %39 = dma.done [#allocation2], %s38
  %40 = vsyncmov [#allocation2]
  %s41 = vpop.sfrf %40
  %p42 = scmp.eq.s32.totalorder %s41, 0
  %p43 = pneg %p42
  %45 = shalt.err (%p43)
  %s46 = scalar_lea.sflag [#allocation2], 1
  %47 = vsyncmov %s46
  %s48 = vpop.sfrf %47
  %p49 = scmp.eq.s32.totalorder %s48, 0
  %p50 = pneg %p49
  %52 = shalt.err (%p50)

</llo_original>
